<compile_context>
chip_gen: v7x
topology: tpu7x:2x2x1
jax: 0.10.0
libtpu: 0.0.40
codegen_flags: <defaults>
</compile_context>

<pallas_src>
import functools
import math

import jax
import jax.numpy as jnp
from jax import lax
from jax.experimental import pallas as pl
from jax.experimental.pallas import tpu as pltpu

_NEG10_OVER_LN10 = -10.0 / math.log(10.0)


# ----------------------------------------------------------------------------
# Kernels
# ----------------------------------------------------------------------------
def _psnr_kernel_simple(ref_ref, gen_ref, out_ref, *, scale, eps):
    """Full feature extent per block: grid = (num_row_tiles,)."""
    diff = ref_ref[...].astype(jnp.float32) - gen_ref[...].astype(jnp.float32)
    ssq = jnp.sum(diff * diff, axis=-1, keepdims=True)
    mse = ssq * scale + eps
    out_ref[...] = (_NEG10_OVER_LN10 * jnp.log(mse)).astype(out_ref.dtype)


def _fold_lanes_to_128(x):
    """Sum 128-wide lane chunks of x (rows, w) -> (rows, 128); w % 128 == 0.

    Log-depth tree of 128-aligned static slices + VPU adds (no XLU work).
    """
    carries = []
    w = x.shape[-1]
    while w > 128:
        nc = w // 128
        if nc % 2 == 1:                       # peel the odd chunk
            carries.append(x[:, (nc - 1) * 128:])
            w = (nc - 1) * 128
            x = x[:, :w]
        half = w // 2
        x = x[:, :half] + x[:, half:]
        w = half
    for c in carries:
        x = x + c
    return x


def _psnr_kernel_tiled(ref_ref, gen_ref, out_ref, acc_ref, *, td, d, scale, eps):
    """Feature axis tiled: grid = (num_row_tiles, num_feature_tiles)."""
    j = pl.program_id(1)

    @pl.when(j == 0)
    def _():
        acc_ref[...] = jnp.zeros_like(acc_ref)

    diff = ref_ref[...].astype(jnp.float32) - gen_ref[...].astype(jnp.float32)
    sq = diff * diff
    if d % td != 0:
        # Masked last feature tile (only traced when D is not a multiple of td).
        col = lax.broadcasted_iota(jnp.int32, sq.shape, 1) + j * td
        sq = jnp.where(col < d, sq, 0.0)

    # Lane-dense accumulation: plain VPU adds on full vregs every step.
    acc_ref[...] += _fold_lanes_to_128(sq)

    @pl.when(j == pl.num_programs(1) - 1)
    def _():
        ssq = jnp.sum(acc_ref[...], axis=-1, keepdims=True)   # single XLU reduce
        mse = ssq * scale + eps
        out_ref[...] = (_NEG10_OVER_LN10 * jnp.log(mse)).astype(out_ref.dtype)


# ----------------------------------------------------------------------------
# Tile / VMEM selection
# ----------------------------------------------------------------------------
def _vmem_budget():
    """(per-input block bytes, vmem_limit_bytes) derived from the chip."""
    cap = 64 << 20
    try:
        info = pltpu.get_tpu_info()
        cap = int(getattr(info, "vmem_capacity_bytes", cap)) or cap
    except Exception:
        pass
    # 2 inputs x 2 pipeline buffers; keep the streamed footprint <= ~32 MiB so
    # it fits v7x's 64 MiB with headroom and leaves slack on v5e/v6e (128 MiB).
    total_inputs = min(cap // 2, 32 << 20)
    per_block = total_inputs // 4
    vmem_limit = min(cap - (8 << 20), total_inputs + (16 << 20))
    return per_block, vmem_limit


def _round_up(x, m):
    return ((x + m - 1) // m) * m


def _choose_tiles(n_rows, d, itemsize, per_block_bytes, row_align):
    """Pick (row_tile, feature_tile) so one input block is <= per_block_bytes.

    Preference order:
      1. whole problem in one block,
      2. full-feature rows-tiled blocks (no in-kernel accumulator needed),
      3. feature-tiled blocks: td = largest multiple-of-128 divisor of D that
         fits (masked last tile as a fallback for awkward D).
    """
    row_bytes = max(d * itemsize, 1)
    if n_rows * row_bytes <= per_block_bytes:
        return n_rows, d
    rows_fit = per_block_bytes // row_bytes
    if rows_fit >= row_align:
        tr = (rows_fit // row_align) * row_align
        if tr >= n_rows:
            tr = n_rows
        return tr, d
    # Feature tiling needed (very large images).
    tr = row_align if n_rows >= row_align else n_rows
    max_td = max(128, ((per_block_bytes // (tr * itemsize)) // 128) * 128)
    td = None
    for cand in range(min(max_td, _round_up(d, 128)), 127, -128):
        if d % cand == 0:
            td = cand
            break
    if td is None:
        td = min(max_td, _round_up(d, 128))   # last tile masked in-kernel
    return tr, td


# ----------------------------------------------------------------------------
# Wrapper
# ----------------------------------------------------------------------------
def psnr_pallas(reference_observations, generated_observations,
                value_range=1.0, eps=1e-8, _force_block_bytes=None):
    """reference/generated: (bs, observations_count, channels, height, width).
    Returns (bs, observations_count) float32 PSNR scores."""
    assert reference_observations.shape == generated_observations.shape
    bs, obs = reference_observations.shape[:2]
    n_rows = bs * obs
    d = int(math.prod(reference_observations.shape[2:]))

    # Free reshapes only: (bs, obs, C, H, W) -> (bs*obs, C*H*W) lane-dense rows.
    ref2 = reference_observations.reshape(n_rows, d)
    gen2 = generated_observations.reshape(n_rows, d)

    itemsize = jnp.dtype(ref2.dtype).itemsize
    row_align = max(8, 32 // itemsize)     # 8 for f32, 16 for bf16, 32 for int8
    per_block, vmem_limit = _vmem_budget()
    if _force_block_bytes is not None:     # test hook: exercise the tiled path
        per_block = int(_force_block_bytes)
    tr, td = _choose_tiles(n_rows, d, itemsize, per_block, row_align)
    num_r = pl.cdiv(n_rows, tr)
    num_d = pl.cdiv(d, td)

    inv_range = 1.0 / float(value_range)
    scale = inv_range * inv_range / float(d)   # folded range scaling + mean

    if num_d == 1:
        kernel = functools.partial(_psnr_kernel_simple,
                                   scale=scale, eps=float(eps))
        grid = (num_r,)
        in_specs = [pl.BlockSpec((tr, td), lambda i: (i, 0)),
                    pl.BlockSpec((tr, td), lambda i: (i, 0))]
        out_specs = pl.BlockSpec((tr, 1), lambda i: (i, 0))
        scratch_shapes = []
        dims = ("parallel",)
    else:
        kernel = functools.partial(_psnr_kernel_tiled, td=td, d=d,
                                   scale=scale, eps=float(eps))
        grid = (num_r, num_d)                  # reduction axis last
        in_specs = [pl.BlockSpec((tr, td), lambda i, j: (i, j)),
                    pl.BlockSpec((tr, td), lambda i, j: (i, j))]
        out_specs = pl.BlockSpec((tr, 1), lambda i, j: (i, 0))
        scratch_shapes = [pltpu.VMEM((tr, 128), jnp.float32)]
        dims = ("parallel", "arbitrary")

    out = pl.pallas_call(
        kernel,
        out_shape=jax.ShapeDtypeStruct((n_rows, 1), jnp.float32),
        grid_spec=pltpu.PrefetchScalarGridSpec(
            num_scalar_prefetch=0,
            grid=grid,
            in_specs=in_specs,
            out_specs=out_specs,
            scratch_shapes=scratch_shapes),
        compiler_params=pltpu.CompilerParams(
            dimension_semantics=dims,
            vmem_limit_bytes=vmem_limit),
    )(ref2, gen2)

    return out.reshape(bs, obs)


# ----------------------------------------------------------------------------
# Pure-JAX reference (mirrors the PyTorch module) for correctness checking.
# ----------------------------------------------------------------------------
def psnr_reference(reference_observations, generated_observations,
                   value_range=1.0, eps=1e-8):
    r = reference_observations / value_range
    g = generated_observations / value_range
    mse = jnp.mean((r - g) ** 2, axis=(2, 3, 4))
    return -10.0 * jnp.log10(mse + eps)


if __name__ == "__main__":
    # (bs, observations_count, channels, height, width)
    bs, obs, C, H, W = 2, 8, 3, 16, 16

    key = jax.random.PRNGKey(0)
    k1, k2 = jax.random.split(key, 2)

    reference = jax.random.uniform(k1, (bs, obs, C, H, W), jnp.float32,
                                   minval=0.0, maxval=1.0)
    noise = 0.05 * jax.random.normal(k2, (bs, obs, C, H, W), jnp.float32)
    generated = jnp.clip(reference + noise, 0.0, 1.0)

    score_ref = psnr_reference(reference, generated, value_range=1.0)

    # Fast path: whole problem in a single block (what real use hits here).
    score = psnr_pallas(reference, generated, value_range=1.0)
    jax.block_until_ready(score)
    assert score.shape == (bs, obs)
    assert jnp.allclose(score, score_ref, atol=1e-4, rtol=1e-4), (
        "fast path mismatch vs reference:\n%s\n%s" % (score, score_ref))

    # Tiled path: force a tiny block budget so the (parallel row axis,
    # arbitrary feature axis) grid with the lane-dense accumulator is exercised.
    score_tiled = psnr_pallas(reference, generated, value_range=1.0,
                              _force_block_bytes=8 << 10)
    jax.block_until_ready(score_tiled)
    assert jnp.allclose(score_tiled, score_ref, atol=1e-4, rtol=1e-4), (
        "tiled path mismatch vs reference:\n%s\n%s" % (score_tiled, score_ref))

    print("KERNEL_OK")
</pallas_src>

<mosaic_0001>
module attributes {stable_mosaic.version = 11 : i64} {
  func.func @_psnr_kernel_simple(%arg0: i32, %arg1: memref<16x768xf32, #tpu.memory_space<vmem>>, %arg2: memref<16x768xf32, #tpu.memory_space<vmem>>, %arg3: memref<16x1xf32, #tpu.memory_space<vmem>>) attributes {dimension_semantics = [#tpu.dimension_semantics<parallel>], iteration_bounds = array<i64: 1>, scalar_prefetch = 0 : i64, scratch_operands = 0 : i64, tpu.core_type = #tpu.core_type<tc>, window_params = [{transform_indices = @transform_0, window_bounds = array<i64: 16, 768>}, {transform_indices = @transform_1, window_bounds = array<i64: 16, 768>}, {transform_indices = @transform_2, window_bounds = array<i64: 16, 1>}]} {
    %c0 = arith.constant 0 : index
    %c0_0 = arith.constant 0 : index
    %0 = vector.load %arg1[%c0, %c0_0] : memref<16x768xf32, #tpu.memory_space<vmem>>, vector<16x768xf32>
    %c0_1 = arith.constant 0 : index
    %c0_2 = arith.constant 0 : index
    %1 = vector.load %arg2[%c0_1, %c0_2] : memref<16x768xf32, #tpu.memory_space<vmem>>, vector<16x768xf32>
    %2 = arith.subf %0, %1 : vector<16x768xf32>
    %3 = arith.mulf %2, %2 : vector<16x768xf32>
    %cst = arith.constant dense<0.000000e+00> : vector<16xf32>
    %4 = vector.multi_reduction <add>, %3, %cst [1] : vector<16x768xf32> to vector<16xf32>
    %5 = vector.shape_cast %4 : vector<16xf32> to vector<16x1xf32>
    %cst_3 = arith.constant 0.00130208337 : f32
    %6 = vector.broadcast %cst_3 : f32 to vector<16x1xf32>
    %7 = arith.mulf %5, %6 : vector<16x1xf32>
    %cst_4 = arith.constant 9.99999993E-9 : f32
    %8 = vector.broadcast %cst_4 : f32 to vector<16x1xf32>
    %9 = arith.addf %7, %8 : vector<16x1xf32>
    %10 = math.log %9 : vector<16x1xf32>
    %cst_5 = arith.constant -4.34294462 : f32
    %11 = vector.broadcast %cst_5 : f32 to vector<16x1xf32>
    %12 = arith.mulf %11, %10 : vector<16x1xf32>
    %c0_6 = arith.constant 0 : index
    %c0_7 = arith.constant 0 : index
    %13 = vector.load %arg3[%c0_6, %c0_7] : memref<16x1xf32, #tpu.memory_space<vmem>>, vector<16x1xf32>
    tpu.vector_store %arg3[%c0_6, %c0_7], %12 {strides = array<i32>} : memref<16x1xf32, #tpu.memory_space<vmem>>, vector<16x1xf32>,
    return
  }
  func.func @transform_0(%arg0: i32) -> (i32, i32) {
    %c0_i32 = arith.constant 0 : i32
    %c0_i32_0 = arith.constant 0 : i32
    return %arg0, %c0_i32 : i32, i32
  }
  func.func @transform_1(%arg0: i32) -> (i32, i32) {
    %c0_i32 = arith.constant 0 : i32
    %c0_i32_0 = arith.constant 0 : i32
    return %arg0, %c0_i32 : i32, i32
  }
  func.func @transform_2(%arg0: i32) -> (i32, i32) {
    %c0_i32 = arith.constant 0 : i32
    %c0_i32_0 = arith.constant 0 : i32
    return %arg0, %c0_i32 : i32, i32
  }
}

</mosaic_0001>

<llo_original>
// kernel: tpu_custom_call.1
$region0: #{tpu_custom_call.1}
  #allocation0 [shape = 'u32[]', space=smem, size = 0x4, offset = 0x4, fixed_abs, tag = 'smem constant byte address 0x4 - core index']
  #allocation1 [shape = 'u32[144,128]{1,0:T(1,128)}', space=vmem, size = 0x12000, scoped, tag = 'internal scratch']
  %s0 = inlined_call_operand.hbm [shape: f32[16,768], index: 0, kind: input, shape index: {}]
  %s1 = inlined_call_operand.hbm [shape: f32[16,768], index: 1, kind: input, shape index: {}]
  %s2 = inlined_call_operand.vmem [shape: f32[16,1], index: 2, kind: output, shape index: {}]
  %s3 = sld [smem:[#allocation0]]
  $region26: #{tpu_custom_call.1} parent=0
    _
  %s5 = ssub.s32 1, %s3
  %s6 = scalar_select 0, %s5, %s3
  $region1: #{tpu_custom_call.1} parent=0
    #allocation2 [shape = 'u8[49152]{0}', space=vmem, size = 0xc000, scoped, tag = 'input window, operand 0, single buffered']
    #allocation3 [shape = 's32[1]{0}', space=sflag, size = 0x4, scoped, tag = 'scoped memory for tpu_custom_call.1']
    #allocation4 [shape = 'u8[49152]{0}', space=vmem, size = 0xc000, scoped, tag = 'input window, operand 1, single buffered']
    #allocation5 [shape = 's32[1]{0}', space=sflag, size = 0x4, scoped, tag = 'scoped memory for tpu_custom_call.1']
    %7 = vsyncpa [#allocation3], 0
    %8 = vsyncpa [#allocation5], 0
    // Predicated region
    $region2: #{tpu_custom_call.1} parent=1 // pred_check
      _
    $region3: #{tpu_custom_call.1} parent=1 // pred_check_branch
      %10 = sbr.rel (0) target = $region5
    $region4: #{tpu_custom_call.1} parent=1 // pred_region
      %s12 = ssub.s32 1536, 1536
      %13 = vsyncadd [#allocation3], %s12
      %s14 = sshll.u32 [#allocation2], 4
      %s15 = int_to_ptr.vmem [resolvable:$true] %s14
      %20 = dma.hbm_to_vmem [thread:$0]  %s0, 1536, %s15, [#allocation3], 768, 768, 48
    $region5: #{tpu_custom_call.1} parent=1 // pred_fallthru
      _
    // Predicated region
    $region6: #{tpu_custom_call.1} parent=1 // pred_check
      _
    $region7: #{tpu_custom_call.1} parent=1 // pred_check_branch
      %22 = sbr.rel (0) target = $region9
    $region8: #{tpu_custom_call.1} parent=1 // pred_region
      %s24 = ssub.s32 1536, 1536
      %25 = vsyncadd [#allocation5], %s24
      %s26 = sshll.u32 [#allocation4], 4
      %s27 = int_to_ptr.vmem [resolvable:$true] %s26
      %32 = dma.hbm_to_vmem [thread:$0]  %s1, 1536, %s27, [#allocation5], 768, 768, 48
    $region9: #{tpu_custom_call.1} parent=1 // pred_fallthru
      _
    // Predicated region
    $region10: #{tpu_custom_call.1} parent=1 // pred_check
      _
    $region11: #{tpu_custom_call.1} parent=1 // pred_check_branch
      %34 = sbr.rel (0) target = $region13
    $region12: #{tpu_custom_call.1} parent=1 // pred_region
      %35 = dma.done [#allocation3], 1536
    $region13: #{tpu_custom_call.1} parent=1 // pred_fallthru
      _
    // Predicated region
    $region14: #{tpu_custom_call.1} parent=1 // pred_check
      _
    $region15: #{tpu_custom_call.1} parent=1 // pred_check_branch
      %37 = sbr.rel (0) target = $region17
    $region16: #{tpu_custom_call.1} parent=1 // pred_region
      %38 = dma.done [#allocation5], 1536
    $region17: #{tpu_custom_call.1} parent=1 // pred_fallthru
      _
    %v39 = vld [vmem:[#allocation2] sm:$0xff]
    %v40 = vld [vmem:[#allocation2 + $0x8] sm:$0xff]
    %v41 = vld [vmem:[#allocation2 + $0x10] sm:$0xff]
    %v42 = vld [vmem:[#allocation2 + $0x18] sm:$0xff]
    %v43 = vld [vmem:[#allocation2 + $0x20] sm:$0xff]
    %v44 = vld [vmem:[#allocation2 + $0x28] sm:$0xff]
    %v45 = vld [vmem:[#allocation2 + $0x30] sm:$0xff]
    %v46 = vld [vmem:[#allocation2 + $0x38] sm:$0xff]
    %v47 = vld [vmem:[#allocation2 + $0x40] sm:$0xff]
    %v48 = vld [vmem:[#allocation2 + $0x48] sm:$0xff]
    %v49 = vld [vmem:[#allocation2 + $0x50] sm:$0xff]
    %v50 = vld [vmem:[#allocation2 + $0x58] sm:$0xff]
    %v51 = vld [vmem:[#allocation4] sm:$0xff]
    %v52 = vld [vmem:[#allocation4 + $0x8] sm:$0xff]
    %v53 = vld [vmem:[#allocation4 + $0x10] sm:$0xff]
    %v54 = vld [vmem:[#allocation4 + $0x18] sm:$0xff]
    %v55 = vld [vmem:[#allocation4 + $0x20] sm:$0xff]
    %v56 = vld [vmem:[#allocation4 + $0x28] sm:$0xff]
    %v57 = vld [vmem:[#allocation4 + $0x30] sm:$0xff]
    %v58 = vld [vmem:[#allocation4 + $0x38] sm:$0xff]
    %v59 = vld [vmem:[#allocation4 + $0x40] sm:$0xff]
    %v60 = vld [vmem:[#allocation4 + $0x48] sm:$0xff]
    %v61 = vld [vmem:[#allocation4 + $0x50] sm:$0xff]
    %v62 = vld [vmem:[#allocation4 + $0x58] sm:$0xff]
    %v63 = vsub.f32 %v39, %v51
    %v64 = vsub.f32 %v40, %v52
    %v65 = vsub.f32 %v41, %v53
    %v66 = vsub.f32 %v42, %v54
    %v67 = vsub.f32 %v43, %v55
    %v68 = vsub.f32 %v44, %v56
    %v69 = vsub.f32 %v45, %v57
    %v70 = vsub.f32 %v46, %v58
    %v71 = vsub.f32 %v47, %v59
    %v72 = vsub.f32 %v48, %v60
    %v73 = vsub.f32 %v49, %v61
    %v74 = vsub.f32 %v50, %v62
    %v75 = vmul.f32 %v63, %v63
    %v76 = vmul.f32 %v64, %v64
    %v77 = vmul.f32 %v65, %v65
    %v78 = vmul.f32 %v66, %v66
    %v79 = vmul.f32 %v67, %v67
    %v80 = vmul.f32 %v68, %v68
    %v81 = vmul.f32 %v69, %v69
    %v82 = vmul.f32 %v70, %v70
    %v83 = vmul.f32 %v71, %v71
    %v84 = vmul.f32 %v72, %v72
    %v85 = vmul.f32 %v73, %v73
    %v86 = vmul.f32 %v74, %v74
    %v87 = vadd.f32 %v75, %v76
    %v88 = vadd.f32 %v87, %v77
    %v89 = vadd.f32 %v88, %v78
    %v90 = vadd.f32 %v89, %v79
    %v91 = vadd.f32 %v90, %v80
    %92 = vadd.xlane.f32.xlu0 %v91
    %v93 = vpop.xlane.xlu0 %92
    %v94 = vadd.f32 %v81, %v82
    %v95 = vadd.f32 %v94, %v83
    %v96 = vadd.f32 %v95, %v84
    %v97 = vadd.f32 %v96, %v85
    %v98 = vadd.f32 %v97, %v86
    %99 = vadd.xlane.f32.xlu0 %v98
    %v100 = vpop.xlane.xlu0 %99
    %v101 = vmul.f32 %v93, 0.0013020834
    %v102 = vmul.f32 %v100, 0.0013020834
    %v103 = vadd.f32 %v101, 1e-08
    %v104 = vadd.f32 %v102, 1e-08
    %v105 = vlog2.pop %v103
    %v106 = vmul.f32 %v105, 0.6931472
    %v107 = vlog2.pop %v104
    %v108 = vmul.f32 %v107, 0.6931472
    %v109 = vmul.f32 %v106, -4.3429446
    %v110 = vmul.f32 %v108, -4.3429446
    %vm111 = vcmask 7168
    %112 = vst.msk [vmem:[%s2] sm:$0xff] %vm111, %v109
    %113 = vst.msk [vmem:[%s2 + $0x8] sm:$0xff] %vm111, %v110
    // Predicated region
    $region18: #{tpu_custom_call.1} parent=1 // pred_check
      _
    $region19: #{tpu_custom_call.1} parent=1 // pred_check_branch
      %115 = sbr.rel (0) target = $region21
    $region20: #{tpu_custom_call.1} parent=1 // pred_region
      _
    $region21: #{tpu_custom_call.1} parent=1 // pred_fallthru
      _
    // Predicated region
    $region22: #{tpu_custom_call.1} parent=1 // pred_check
      _
    $region23: #{tpu_custom_call.1} parent=1 // pred_check_branch
      %117 = sbr.rel (0) target = $region25
    $region24: #{tpu_custom_call.1} parent=1 // pred_region
      _
    $region25: #{tpu_custom_call.1} parent=1 // pred_fallthru
      _
    %118 = vsyncpa [#allocation3], 1
    %119 = vsyncpa [#allocation5], 1

</llo_original>
